<compile_context>
chip_gen: v5e
topology: v5e:2x2
jax: 0.10.0
libtpu: 0.0.40
codegen_flags: <defaults>
</compile_context>

<pallas_src>
import jax
import jax.numpy as jnp
from jax.experimental import pallas as pl
from jax.experimental.pallas import tpu as pltpu


def _round_up(x, m):
    return (x + m - 1) // m * m


def _choose_b_tile(bsz, l, hidden, att_dim, att_hops, itemsize,
                   budget_bytes=12 * 1024 * 1024):
    """Pick how many batches to process per grid step, within a VMEM budget."""
    per_b = 2 * l * hidden * itemsize                      # x block, double-buffered
    per_b += 2 * (att_hops * l + att_hops * hidden) * 4    # output blocks, double-buffered
    per_b += l * (att_dim + att_hops) * 4                  # in-kernel f32 temporaries (h, scores)
    fixed = 2 * (hidden * att_dim + att_dim * att_hops) * itemsize   # resident weights
    bt = int(max(1, (budget_bytes - fixed) // max(per_b, 1)))
    bt = min(bt, bsz)
    if bt >= 8:
        bt -= bt % 8                                       # keep sublane-friendly tiles
    return max(bt, 1)


def _self_att_kernel(length_ref, x_ref, w1_ref, w2_ref, alphas_ref, result_ref):
    bt, l, hidden = x_ref.shape            # static block shape
    b0 = pl.program_id(0) * bt

    x = x_ref[...]                                       # (bt, l, hidden), matmul dtype
    x2d = x.reshape(bt * l, hidden)                      # l padded to %8 -> free collapse

    # Batched projections: one large MXU matmul each, f32 accumulation.
    h = jnp.tanh(jnp.dot(x2d, w1_ref[...],
                         preferred_element_type=jnp.float32))           # (bt*l, att_dim) f32
    scores = jnp.dot(h.astype(w2_ref.dtype), w2_ref[...],
                     preferred_element_type=jnp.float32)                # (bt*l, att_hops) f32

    # Cheap per-batch tail: fused masked softmax + final bmm (unrolled, bt is static).
    for i in range(bt):
        seqlen = length_ref[b0 + i]                                     # SMEM scalar
        s = jnp.transpose(scores[i * l:(i + 1) * l, :])                 # (att_hops, l)
        pos = jax.lax.broadcasted_iota(jnp.int32, s.shape, 1)
        s = jnp.where(pos < seqlen, s, jnp.float32(-1e30))              # fused length mask
        m = jnp.max(s, axis=-1, keepdims=True)
        e = jnp.exp(s - m)
        inv = pl.reciprocal(jnp.sum(e, axis=-1, keepdims=True), approx=True)
        a = e * inv                                                     # (att_hops, l) f32
        alphas_ref[i] = a
        result_ref[i] = jnp.dot(a.astype(x.dtype), x[i],
                                preferred_element_type=jnp.float32)     # (att_hops, hidden)


def self_attentive_encoder(inputs, length, w1, w2, *, matmul_dtype=jnp.bfloat16):
    """inputs: (bsz, l, hidden); length: (bsz,) int; w1: (att_dim, hidden); w2: (att_hops, att_dim)."""
    bsz, l, hidden = inputs.shape
    att_dim = w1.shape[0]
    att_hops = w2.shape[0]
    itemsize = jnp.dtype(matmul_dtype).itemsize

    # Pre-cast / pre-transpose once outside the kernel (no per-step weight .T).
    x = jnp.asarray(inputs, matmul_dtype)
    w1t = jnp.asarray(w1, matmul_dtype).T                 # (hidden, att_dim)
    w2t = jnp.asarray(w2, matmul_dtype).T                 # (att_dim, att_hops)
    length = jnp.asarray(length, jnp.int32)

    # Pad seq len to a multiple of 8 so the (bt, l, hidden) -> (bt*l, hidden) collapse is free.
    l_pad = _round_up(l, 8)
    if l_pad != l:
        x = jnp.pad(x, ((0, 0), (0, l_pad - l), (0, 0)))

    b_tile = _choose_b_tile(bsz, l_pad, hidden, att_dim, att_hops, itemsize)
    bsz_pad = _round_up(bsz, b_tile)
    if bsz_pad != bsz:
        x = jnp.pad(x, ((0, bsz_pad - bsz), (0, 0), (0, 0)))
        length = jnp.pad(length, (0, bsz_pad - bsz))      # padded rows: length 0 -> masked away

    grid = (bsz_pad // b_tile,)

    grid_spec = pltpu.PrefetchScalarGridSpec(
        num_scalar_prefetch=1,                            # `length` lands in SMEM
        grid=grid,
        in_specs=[
            pl.BlockSpec((b_tile, l_pad, hidden), lambda b, ln: (b, 0, 0)),
            pl.BlockSpec((hidden, att_dim), lambda b, ln: (0, 0)),       # resident weights
            pl.BlockSpec((att_dim, att_hops), lambda b, ln: (0, 0)),
        ],
        out_specs=[
            pl.BlockSpec((b_tile, att_hops, l_pad), lambda b, ln: (b, 0, 0)),
            pl.BlockSpec((b_tile, att_hops, hidden), lambda b, ln: (b, 0, 0)),
        ],
    )

    flops = (2 * bsz_pad * l_pad * hidden * att_dim
             + 2 * bsz_pad * l_pad * att_dim * att_hops
             + 2 * bsz_pad * att_hops * l_pad * hidden)
    transcendentals = bsz_pad * l_pad * att_dim + bsz_pad * att_hops * l_pad
    bytes_accessed = (bsz_pad * l_pad * hidden * itemsize
                      + (hidden * att_dim + att_dim * att_hops) * itemsize
                      + bsz_pad * 4
                      + bsz_pad * att_hops * (l_pad + hidden) * 4)

    alphas, result = pl.pallas_call(
        _self_att_kernel,
        grid_spec=grid_spec,
        out_shape=(
            jax.ShapeDtypeStruct((bsz_pad, att_hops, l_pad), jnp.float32),
            jax.ShapeDtypeStruct((bsz_pad, att_hops, hidden), jnp.float32),
        ),
        compiler_params=pltpu.CompilerParams(
            dimension_semantics=("parallel",),
            vmem_limit_bytes=32 * 1024 * 1024,
        ),
        cost_estimate=pl.CostEstimate(
            flops=int(flops),
            transcendentals=int(transcendentals),
            bytes_accessed=int(bytes_accessed),
        ),
    )(length, x, w1t, w2t)

    alphas = alphas[:bsz, :, :l]
    result = result[:bsz]
    supplements = {"attention": alphas, "info": []}
    return result, supplements


def _reference(inputs, length, w1, w2, matmul_dtype=jnp.float32):
    """Pure-JAX reference of the PyTorch forward (dropout = identity).

    With matmul_dtype=bf16 it mirrors the kernel's operand casts (f32 accumulation);
    with f32 it is the plain full-precision module semantics.
    """
    bsz, l, hidden = inputs.shape
    x = inputs.astype(matmul_dtype)
    w1t = w1.astype(matmul_dtype).T
    w2t = w2.astype(matmul_dtype).T
    h = jnp.tanh(jnp.einsum("blh,ha->bla", x, w1t, preferred_element_type=jnp.float32))
    scores = jnp.einsum("bla,ak->blk", h.astype(matmul_dtype), w2t,
                        preferred_element_type=jnp.float32)
    scores = jnp.transpose(scores, (0, 2, 1))             # (bsz, hops, l)
    a = jax.nn.softmax(scores, axis=-1)
    mask = (jnp.arange(l)[None, :] < length[:, None]).astype(jnp.float32)
    a = a * mask[:, None, :] + 1e-20
    a = a / jnp.sum(a, axis=-1, keepdims=True)
    result = jnp.einsum("bkl,blh->bkh", a.astype(matmul_dtype), x,
                        preferred_element_type=jnp.float32)
    return result, a


if __name__ == "__main__":
    # Small, module-consistent shapes.
    bsz, l, hidden = 2, 8, 32
    att_dim, att_hops = 64, 4

    key = jax.random.PRNGKey(0)
    k_x, k_w1, k_w2 = jax.random.split(key, 3)

    inputs = jax.random.normal(k_x, (bsz, l, hidden), dtype=jnp.float32)
    length = jnp.array([8, 5], dtype=jnp.int32)

    # kaiming_normal (fan_in mode): std = sqrt(2 / fan_in)
    w1 = jax.random.normal(k_w1, (att_dim, hidden), dtype=jnp.float32) * (2.0 / hidden) ** 0.5
    w2 = jax.random.normal(k_w2, (att_hops, att_dim), dtype=jnp.float32) * (2.0 / att_dim) ** 0.5

    result, supplements = self_attentive_encoder(inputs, length, w1, w2)
    result = jax.block_until_ready(result)
    alphas = jax.block_until_ready(supplements["attention"])

    # Tight-ish check against a reference that mirrors the kernel's bf16 operand casts.
    ref_res_bf16, ref_a_bf16 = _reference(inputs, length, w1, w2, matmul_dtype=jnp.bfloat16)
    assert jnp.allclose(result, ref_res_bf16, atol=1e-2, rtol=1e-2)
    assert jnp.allclose(alphas, ref_a_bf16, atol=1e-2, rtol=1e-2)

    # Loose check against full-f32 module semantics (bf16 matmul operands only diff).
    ref_res_f32, ref_a_f32 = _reference(inputs, length, w1, w2, matmul_dtype=jnp.float32)
    assert jnp.allclose(result, ref_res_f32, atol=5e-2, rtol=5e-2)
    assert jnp.allclose(alphas, ref_a_f32, atol=5e-2, rtol=5e-2)

    print("KERNEL_OK")
</pallas_src>

<mosaic_0001>
module attributes {stable_mosaic.version = 11 : i64} {
  func.func @_self_att_kernel(%arg0: i32, %arg1: memref<2xi32, #tpu.memory_space<smem>>, %arg2: memref<2x8x32xbf16, #tpu.memory_space<vmem>>, %arg3: memref<32x64xbf16, #tpu.memory_space<vmem>>, %arg4: memref<64x4xbf16, #tpu.memory_space<vmem>>, %arg5: memref<2x4x8xf32, #tpu.memory_space<vmem>>, %arg6: memref<2x4x32xf32, #tpu.memory_space<vmem>>) attributes {dimension_semantics = [#tpu.dimension_semantics<parallel>], iteration_bounds = array<i64: 1>, scalar_prefetch = 1 : i64, scratch_operands = 0 : i64, tpu.core_type = #tpu.core_type<tc>, window_params = [{transform_indices = @transform_0, window_bounds = array<i64: 2, 8, 32>}, {pipeline_mode = #tpu.pipeline_mode<synchronous>, transform_indices = @transform_1, window_bounds = array<i64: 32, 64>}, {pipeline_mode = #tpu.pipeline_mode<synchronous>, transform_indices = @transform_2, window_bounds = array<i64: 64, 4>}, {transform_indices = @transform_3, window_bounds = array<i64: 2, 4, 8>}, {transform_indices = @transform_4, window_bounds = array<i64: 2, 4, 32>}]} {
    %c2_i32 = arith.constant 2 : i32
    %0 = arith.muli %arg0, %c2_i32 : i32
    %c0 = arith.constant 0 : index
    %c0_0 = arith.constant 0 : index
    %c0_1 = arith.constant 0 : index
    %1 = vector.load %arg2[%c0, %c0_0, %c0_1] : memref<2x8x32xbf16, #tpu.memory_space<vmem>>, vector<2x8x32xbf16>
    %2 = vector.shape_cast %1 : vector<2x8x32xbf16> to vector<16x32xbf16>
    %c0_2 = arith.constant 0 : index
    %c0_3 = arith.constant 0 : index
    %3 = vector.load %arg3[%c0_2, %c0_3] : memref<32x64xbf16, #tpu.memory_space<vmem>>, vector<32x64xbf16>
    %cst = arith.constant dense<0.000000e+00> : vector<16x64xf32>
    %4 = tpu.matmul %2, %3, %cst {dimension_numbers = #tpu.dot_dimension_numbers<[1], [0], [0], [1], [0, 0, 1, 1], [], []>} : vector<16x32xbf16>, vector<32x64xbf16>, vector<16x64xf32> -> vector<16x64xf32>
    %5 = math.tanh %4 : vector<16x64xf32>
    %6 = arith.truncf %5 : vector<16x64xf32> to vector<16x64xbf16>
    %c0_4 = arith.constant 0 : index
    %c0_5 = arith.constant 0 : index
    %7 = vector.load %arg4[%c0_4, %c0_5] : memref<64x4xbf16, #tpu.memory_space<vmem>>, vector<64x4xbf16>
    %cst_6 = arith.constant dense<0.000000e+00> : vector<16x4xf32>
    %8 = tpu.matmul %6, %7, %cst_6 {dimension_numbers = #tpu.dot_dimension_numbers<[1], [0], [0], [1], [0, 0, 1, 1], [], []>} : vector<16x64xbf16>, vector<64x4xbf16>, vector<16x4xf32> -> vector<16x4xf32>
    %c0_i32 = arith.constant 0 : i32
    %9 = arith.addi %0, %c0_i32 : i32
    %10 = arith.index_cast %9 : i32 to index
    %11 = memref.load %arg1[%10] : memref<2xi32, #tpu.memory_space<smem>>
    %12 = vector.extract_strided_slice %8 {offsets = [0, 0], sizes = [8, 4], strides = [1, 1]} : vector<16x4xf32> to vector<8x4xf32>
    %13 = tpu.transpose %12, [1, 0] : vector<8x4xf32> -> vector<4x8xf32>
    %14 = tpu.iota {dimensions = array<i32: 1>} : vector<4x8xi32>
    %15 = vector.broadcast %11 : i32 to vector<4x8xi32>
    %16 = arith.cmpi slt, %14, %15 : vector<4x8xi32>
    %cst_7 = arith.constant -1.000000e+30 : f32
    %17 = vector.broadcast %cst_7 : f32 to vector<4x8xf32>
    %18 = arith.select %16, %13, %17 : vector<4x8xi1>, vector<4x8xf32>
    %cst_8 = arith.constant dense<0xFF800000> : vector<4xf32>
    %19 = vector.multi_reduction <maximumf>, %18, %cst_8 [1] : vector<4x8xf32> to vector<4xf32>
    %20 = vector.shape_cast %19 : vector<4xf32> to vector<4x1xf32>
    %21 = vector.broadcast %20 : vector<4x1xf32> to vector<4x8xf32>
    %22 = arith.subf %18, %21 : vector<4x8xf32>
    %23 = math.exp %22 : vector<4x8xf32>
    %cst_9 = arith.constant dense<0.000000e+00> : vector<4xf32>
    %24 = vector.multi_reduction <add>, %23, %cst_9 [1] : vector<4x8xf32> to vector<4xf32>
    %25 = vector.shape_cast %24 : vector<4xf32> to vector<4x1xf32>
    %26 = tpu.reciprocal %25 {approx = true} : vector<4x1xf32> -> vector<4x1xf32>
    %27 = vector.broadcast %26 : vector<4x1xf32> to vector<4x8xf32>
    %28 = arith.mulf %23, %27 : vector<4x8xf32>
    %c0_10 = arith.constant 0 : index
    %c0_11 = arith.constant 0 : index
    %c0_12 = arith.constant 0 : index
    %29 = vector.load %arg5[%c0_10, %c0_11, %c0_12] : memref<2x4x8xf32, #tpu.memory_space<vmem>>, vector<1x4x8xf32>
    %30 = vector.shape_cast %29 : vector<1x4x8xf32> to vector<4x8xf32>
    %31 = vector.shape_cast %28 : vector<4x8xf32> to vector<1x4x8xf32>
    tpu.vector_store %arg5[%c0_10, %c0_11, %c0_12], %31 {strides = array<i32>} : memref<2x4x8xf32, #tpu.memory_space<vmem>>, vector<1x4x8xf32>,
    %32 = arith.truncf %28 : vector<4x8xf32> to vector<4x8xbf16>
    %33 = vector.extract_strided_slice %1 {offsets = [0, 0, 0], sizes = [1, 8, 32], strides = [1, 1, 1]} : vector<2x8x32xbf16> to vector<1x8x32xbf16>
    %34 = vector.shape_cast %33 : vector<1x8x32xbf16> to vector<8x32xbf16>
    %cst_13 = arith.constant dense<0.000000e+00> : vector<4x32xf32>
    %35 = tpu.matmul %32, %34, %cst_13 {dimension_numbers = #tpu.dot_dimension_numbers<[1], [0], [0], [1], [0, 0, 1, 1], [], []>} : vector<4x8xbf16>, vector<8x32xbf16>, vector<4x32xf32> -> vector<4x32xf32>
    %c0_14 = arith.constant 0 : index
    %c0_15 = arith.constant 0 : index
    %c0_16 = arith.constant 0 : index
    %36 = vector.load %arg6[%c0_14, %c0_15, %c0_16] : memref<2x4x32xf32, #tpu.memory_space<vmem>>, vector<1x4x32xf32>
    %37 = vector.shape_cast %36 : vector<1x4x32xf32> to vector<4x32xf32>
    %38 = vector.shape_cast %35 : vector<4x32xf32> to vector<1x4x32xf32>
    tpu.vector_store %arg6[%c0_14, %c0_15, %c0_16], %38 {strides = array<i32>} : memref<2x4x32xf32, #tpu.memory_space<vmem>>, vector<1x4x32xf32>,
    %c1_i32 = arith.constant 1 : i32
    %39 = arith.addi %0, %c1_i32 : i32
    %40 = arith.index_cast %39 : i32 to index
    %41 = memref.load %arg1[%40] : memref<2xi32, #tpu.memory_space<smem>>
    %42 = vector.extract_strided_slice %8 {offsets = [8, 0], sizes = [8, 4], strides = [1, 1]} : vector<16x4xf32> to vector<8x4xf32>
    %43 = tpu.transpose %42, [1, 0] : vector<8x4xf32> -> vector<4x8xf32>
    %44 = tpu.iota {dimensions = array<i32: 1>} : vector<4x8xi32>
    %45 = vector.broadcast %41 : i32 to vector<4x8xi32>
    %46 = arith.cmpi slt, %44, %45 : vector<4x8xi32>
    %cst_17 = arith.constant -1.000000e+30 : f32
    %47 = vector.broadcast %cst_17 : f32 to vector<4x8xf32>
    %48 = arith.select %46, %43, %47 : vector<4x8xi1>, vector<4x8xf32>
    %cst_18 = arith.constant dense<0xFF800000> : vector<4xf32>
    %49 = vector.multi_reduction <maximumf>, %48, %cst_18 [1] : vector<4x8xf32> to vector<4xf32>
    %50 = vector.shape_cast %49 : vector<4xf32> to vector<4x1xf32>
    %51 = vector.broadcast %50 : vector<4x1xf32> to vector<4x8xf32>
    %52 = arith.subf %48, %51 : vector<4x8xf32>
    %53 = math.exp %52 : vector<4x8xf32>
    %cst_19 = arith.constant dense<0.000000e+00> : vector<4xf32>
    %54 = vector.multi_reduction <add>, %53, %cst_19 [1] : vector<4x8xf32> to vector<4xf32>
    %55 = vector.shape_cast %54 : vector<4xf32> to vector<4x1xf32>
    %56 = tpu.reciprocal %55 {approx = true} : vector<4x1xf32> -> vector<4x1xf32>
    %57 = vector.broadcast %56 : vector<4x1xf32> to vector<4x8xf32>
    %58 = arith.mulf %53, %57 : vector<4x8xf32>
    %c1 = arith.constant 1 : index
    %c0_20 = arith.constant 0 : index
    %c0_21 = arith.constant 0 : index
    %59 = vector.load %arg5[%c1, %c0_20, %c0_21] : memref<2x4x8xf32, #tpu.memory_space<vmem>>, vector<1x4x8xf32>
    %60 = vector.shape_cast %59 : vector<1x4x8xf32> to vector<4x8xf32>
    %61 = vector.shape_cast %58 : vector<4x8xf32> to vector<1x4x8xf32>
    tpu.vector_store %arg5[%c1, %c0_20, %c0_21], %61 {strides = array<i32>} : memref<2x4x8xf32, #tpu.memory_space<vmem>>, vector<1x4x8xf32>,
    %62 = arith.truncf %58 : vector<4x8xf32> to vector<4x8xbf16>
    %63 = vector.extract_strided_slice %1 {offsets = [1, 0, 0], sizes = [1, 8, 32], strides = [1, 1, 1]} : vector<2x8x32xbf16> to vector<1x8x32xbf16>
    %64 = vector.shape_cast %63 : vector<1x8x32xbf16> to vector<8x32xbf16>
    %cst_22 = arith.constant dense<0.000000e+00> : vector<4x32xf32>
    %65 = tpu.matmul %62, %64, %cst_22 {dimension_numbers = #tpu.dot_dimension_numbers<[1], [0], [0], [1], [0, 0, 1, 1], [], []>} : vector<4x8xbf16>, vector<8x32xbf16>, vector<4x32xf32> -> vector<4x32xf32>
    %c1_23 = arith.constant 1 : index
    %c0_24 = arith.constant 0 : index
    %c0_25 = arith.constant 0 : index
    %66 = vector.load %arg6[%c1_23, %c0_24, %c0_25] : memref<2x4x32xf32, #tpu.memory_space<vmem>>, vector<1x4x32xf32>
    %67 = vector.shape_cast %66 : vector<1x4x32xf32> to vector<4x32xf32>
    %68 = vector.shape_cast %65 : vector<4x32xf32> to vector<1x4x32xf32>
    tpu.vector_store %arg6[%c1_23, %c0_24, %c0_25], %68 {strides = array<i32>} : memref<2x4x32xf32, #tpu.memory_space<vmem>>, vector<1x4x32xf32>,
    return
  }
  func.func @transform_0(%arg0: i32, %arg1: memref<2xi32, #tpu.memory_space<smem>>) -> (i32, i32, i32) {
    %c0_i32 = arith.constant 0 : i32
    %c0_i32_0 = arith.constant 0 : i32
    %c0_i32_1 = arith.constant 0 : i32
    return %arg0, %c0_i32, %c0_i32_0 : i32, i32, i32
  }
  func.func @transform_1(%arg0: i32, %arg1: memref<2xi32, #tpu.memory_space<smem>>) -> (i32, i32) {
    %c0_i32 = arith.constant 0 : i32
    %c0_i32_0 = arith.constant 0 : i32
    %c0_i32_1 = arith.constant 0 : i32
    return %c0_i32, %c0_i32_0 : i32, i32
  }
  func.func @transform_2(%arg0: i32, %arg1: memref<2xi32, #tpu.memory_space<smem>>) -> (i32, i32) {
    %c0_i32 = arith.constant 0 : i32
    %c0_i32_0 = arith.constant 0 : i32
    %c0_i32_1 = arith.constant 0 : i32
    return %c0_i32, %c0_i32_0 : i32, i32
  }
  func.func @transform_3(%arg0: i32, %arg1: memref<2xi32, #tpu.memory_space<smem>>) -> (i32, i32, i32) {
    %c0_i32 = arith.constant 0 : i32
    %c0_i32_0 = arith.constant 0 : i32
    %c0_i32_1 = arith.constant 0 : i32
    return %arg0, %c0_i32, %c0_i32_0 : i32, i32, i32
  }
  func.func @transform_4(%arg0: i32, %arg1: memref<2xi32, #tpu.memory_space<smem>>) -> (i32, i32, i32) {
    %c0_i32 = arith.constant 0 : i32
    %c0_i32_0 = arith.constant 0 : i32
    %c0_i32_1 = arith.constant 0 : i32
    return %arg0, %c0_i32, %c0_i32_0 : i32, i32, i32
  }
}

</mosaic_0001>

<llo_original>
// kernel: tpu_custom_call.1
$region0: #{tpu_custom_call.1}
  #allocation0 [shape = 'u32[]', space=smem, size = 0x4, offset = 0x4, fixed_abs, tag = 'smem constant byte address 0x4 - core index']
  #allocation1 [shape = 'u32[72,128]{1,0:T(1,128)}', space=vmem, size = 0x9000, scoped, tag = 'internal scratch']
  #allocation2 [shape = 's32[1]{0}', space=sflag, size = 0x4, scoped, tag = 'scoped memory for tpu_custom_call.1']
  #allocation3 [shape = 'u8[512]{0}', space=smem, size = 0x200, scoped, tag = 'prefetched SMEM operand 0']
  %s0 = inlined_call_operand.vmem [shape: s32[2], index: 0, kind: input, shape index: {}]
  %s1 = inlined_call_operand.vmem [shape: bf16[2,8,32], index: 1, kind: input, shape index: {}]
  %s2 = inlined_call_operand.vmem [shape: bf16[32,64], index: 2, kind: input, shape index: {}]
  %s3 = inlined_call_operand.vmem [shape: bf16[64,4], index: 3, kind: input, shape index: {}]
  %s4 = inlined_call_operand.hbm [shape: f32[2,4,8], index: 4, kind: output, shape index: {0}]
  %s5 = inlined_call_operand.hbm [shape: f32[2,4,32], index: 5, kind: output, shape index: {1}]
  %6 = xla_tuple %s4, %s5
  %s7 = sld [smem:[#allocation0]]
  $region30: #{tpu_custom_call.1} parent=0
    _
  %s9 = ssub.s32 1, %s7
  %s10 = scalar_select 0, %s9, %s7
  %s12 = sshll.u32 %s0, 4
  %s13 = int_to_ptr.vmem [resolvable:$true] %s12
  %15 = dma.vmem_to_smem %s13, 16, [#allocation3], [#allocation2]
  %17 = dma.done [#allocation2], 16
  %18 = sfence
  $region1: #{tpu_custom_call.1} parent=0
    #allocation4 [shape = 'u8[4096]{0}', space=vmem, size = 0x1000, scoped, tag = 'output window, operand 0, single buffered']
    #allocation5 [shape = 's32[1]{0}', space=sflag, size = 0x4, scoped, tag = 'scoped memory for tpu_custom_call.1']
    #allocation6 [shape = 'u8[4096]{0}', space=vmem, size = 0x1000, scoped, tag = 'output window, operand 1, single buffered']
    #allocation7 [shape = 's32[1]{0}', space=sflag, size = 0x4, scoped, tag = 'scoped memory for tpu_custom_call.1']
    %19 = vsyncpa [#allocation5], 0
    %20 = vsyncpa [#allocation7], 0
    // Predicated region
    $region2: #{tpu_custom_call.1} parent=1 // pred_check
      _
    $region3: #{tpu_custom_call.1} parent=1 // pred_check_branch
      %22 = sbr.rel (0) target = $region5
    $region4: #{tpu_custom_call.1} parent=1 // pred_region
      _
    $region5: #{tpu_custom_call.1} parent=1 // pred_fallthru
      _
    // Predicated region
    $region6: #{tpu_custom_call.1} parent=1 // pred_check
      _
    $region7: #{tpu_custom_call.1} parent=1 // pred_check_branch
      %24 = sbr.rel (0) target = $region9
    $region8: #{tpu_custom_call.1} parent=1 // pred_region
      _
    $region9: #{tpu_custom_call.1} parent=1 // pred_fallthru
      _
    // Predicated region
    $region10: #{tpu_custom_call.1} parent=1 // pred_check
      _
    $region11: #{tpu_custom_call.1} parent=1 // pred_check_branch
      %26 = sbr.rel (0) target = $region13
    $region12: #{tpu_custom_call.1} parent=1 // pred_region
      _
    $region13: #{tpu_custom_call.1} parent=1 // pred_fallthru
      _
    %s28 = smul.u32 0, 2
    %v29 = vld [vmem:[%s1] sm:$0xf]
    %v30 = vld [vmem:[%s1 + $0x4] sm:$0xf]
    %v31 = vld [vmem:[%s2] sm:$0xf]
    %v32 = vld [vmem:[%s2 + $0x4] sm:$0xf]
    %v33 = vld [vmem:[%s2 + $0x8] sm:$0xf]
    %v34 = vld [vmem:[%s2 + $0xc] sm:$0xf]
    %v37 = vunpack.c.l.b16 %v29
    %v38 = vunpack.c.l.b16 %v30
    %v39 = vpack.c.b16 %v38, %v37
    %v44 = vunpack.c.l.b16 %v31
    %v45 = vunpack.c.l.b16 %v32
    %v46 = vunpack.c.l.b16 %v33
    %v47 = vunpack.c.l.b16 %v34
    %v48 = vpack.c.b16 %v45, %v44
    %v49 = vpack.c.b16 %v47, %v46
    %vm52 = vcmask 261120
    %v54 = vsel %vm52, %v39, 0
    %56 = vmatpush.bf16.msra.mxu0 0
    %57 = vmatpush.bf16.msra.mxu0 0
    %58 = vmatpush.bf16.msra.mxu0 0
    %59 = vmatpush.bf16.msra.mxu0 0
    %60 = vmatpush.bf16.msra.mxu0 0
    %61 = vmatpush.bf16.msra.mxu0 0
    %62 = vmatpush.bf16.msra.mxu0 %v49
    %63 = vmatpush.bf16.msra.mxu0 %v48
    %64 = vmatmul.bf16.gmra.mxu0 %v54
    %v65 = vpop.f32.mrf.mxu0
    %v66 = vadd.f32 0.0, %v65
    %v67 = vpop.f32.mrf.mxu0
    %v68 = vadd.f32 0.0, %v67
    %69 = vdwg.mxu0
    %v70 = vtanh.pop %v66
    %v71 = vtanh.pop %v68
    %v72 = vpack.c.bf16 %v71, %v70
    %v73 = vld [vmem:[%s3] sm:$0xf]
    %v74 = vld [vmem:[%s3 + $0x4] sm:$0xf]
    %v75 = vld [vmem:[%s3 + $0x8] sm:$0xf]
    %v76 = vld [vmem:[%s3 + $0xc] sm:$0xf]
    %v77 = vld [vmem:[%s3 + $0x10] sm:$0xf]
    %v78 = vld [vmem:[%s3 + $0x14] sm:$0xf]
    %v79 = vld [vmem:[%s3 + $0x18] sm:$0xf]
    %v80 = vld [vmem:[%s3 + $0x1c] sm:$0xf]
    %v89 = vunpack.c.l.b16 %v73
    %v90 = vunpack.c.l.b16 %v74
    %v91 = vunpack.c.l.b16 %v75
    %v92 = vunpack.c.l.b16 %v76
    %v93 = vunpack.c.l.b16 %v77
    %v94 = vunpack.c.l.b16 %v78
    %v95 = vunpack.c.l.b16 %v79
    %v96 = vunpack.c.l.b16 %v80
    %v97 = vpack.c.b16 %v90, %v89
    %v98 = vpack.c.b16 %v92, %v91
    %v99 = vpack.c.b16 %v94, %v93
    %v100 = vpack.c.b16 %v96, %v95
    %vm105 = vcmask 523264
    %v107 = vsel %vm105, %v72, 0
    %109 = vmatpush.bf16.msra.mxu0 0
    %110 = vmatpush.bf16.msra.mxu0 0
    %111 = vmatpush.bf16.msra.mxu0 0
    %112 = vmatpush.bf16.msra.mxu0 0
    %113 = vmatpush.bf16.msra.mxu0 %v100
    %114 = vmatpush.bf16.msra.mxu0 %v99
    %115 = vmatpush.bf16.msra.mxu0 %v98
    %116 = vmatpush.bf16.msra.mxu0 %v97
    %117 = vmatmul.bf16.gmra.mxu0 %v107
    %v118 = vpop.f32.mrf.mxu0
    %v119 = vadd.f32 0.0, %v118
    %v120 = vpop.f32.mrf.mxu0
    %v121 = vadd.f32 0.0, %v120
    %122 = vdwg.mxu0
    %s123 = sld [smem:[#allocation3 + %s28]]
    %124 = vxpose.xlu0.b32.start [1/16] %v119, 128
    %125 = vxpose.xlu0.b32.cont [2/16] 0.0, 128
    %126 = vxpose.xlu0.b32.cont [3/16] 0.0, 128
    %127 = vxpose.xlu0.b32.cont [4/16] 0.0, 128
    %128 = vxpose.xlu0.b32.cont [5/16] 0.0, 128
    %129 = vxpose.xlu0.b32.cont [6/16] 0.0, 128
    %130 = vxpose.xlu0.b32.cont [7/16] 0.0, 128
    %131 = vxpose.xlu0.b32.cont [8/16] 0.0, 128
    %132 = vxpose.xlu0.b32.cont [9/16] 0.0, 128
    %133 = vxpose.xlu0.b32.cont [10/16] 0.0, 128
    %134 = vxpose.xlu0.b32.cont [11/16] 0.0, 128
    %135 = vxpose.xlu0.b32.cont [12/16] 0.0, 128
    %136 = vxpose.xlu0.b32.cont [13/16] 0.0, 128
    %137 = vxpose.xlu0.b32.cont [14/16] 0.0, 128
    %138 = vxpose.xlu0.b32.cont [15/16] 0.0, 128
    %139 = vxpose.xlu0.b32.end [16/16] 0.0, 128
    %v140 = vpop.trf.xlu0
    %v141 = vpop.trf.xlu0
    %v142 = vpop.trf.xlu0
    %v143 = vpop.trf.xlu0
    %v144 = vpop.trf.xlu0
    %v145 = vpop.trf.xlu0
    %v146 = vpop.trf.xlu0
    %v147 = vpop.trf.xlu0
    %v148 = vpop.trf.xlu0
    %v149 = vpop.trf.xlu0
    %v150 = vpop.trf.xlu0
    %v151 = vpop.trf.xlu0
    %v152 = vpop.trf.xlu0
    %v153 = vpop.trf.xlu0
    %v154 = vpop.trf.xlu0
    %v155 = vpop.trf.xlu0
    %v156 = vlaneseq
    %v157 = vand.u32 %v156, 127
    %v158 = vstv %s123
    %vm159 = vcmp.lt.s32.totalorder %v157, %v158
    %v160 = vsel %vm159, %v140, -1e+30
    %vm161 = vcmask 60416
    %v162 = vsel %vm161, %v160, -inf
    %163 = vmax.xlane.f32.xlu0 %v162
    %v164 = vpop.xlane.xlu0 %163
    %v165 = vsub.f32 %v160, %v164
    %v166 = vmul.f32 %v165, 1.442695
    %v167 = vpow.pop %v166
    %v168 = vsel %vm161, %v167, 0.0
    %169 = vadd.xlane.f32.xlu0 %v168
    %v170 = vpop.xlane.xlu0 %169
    %v171 = vrcp.pop %v170
    %v172 = vmul.f32 %v167, %v171
    %173 = vst.msk [vmem:[#allocation4] sm:$0xf] %vm161, %v172
    %v174 = vpack.c.bf16 %v172, %v172
    %vm175 = vcmask 64512
    %v177 = vsel %vm175, %v174, 0
    %vm179 = vcmask 1043456
    %v181 = vsel %vm179, %v29, 0
    %183 = vmatpush.bf16.msra.mxu0 0
    %184 = vmatpush.bf16.msra.mxu0 0
    %185 = vmatpush.bf16.msra.mxu0 0
    %186 = vmatpush.bf16.msra.mxu0 0
    %187 = vmatpush.bf16.msra.mxu0 0
    %188 = vmatpush.bf16.msra.mxu0 0
    %189 = vmatpush.bf16.msra.mxu0 0
    %190 = vmatpush.bf16.msra.mxu0 %v181
    %191 = vmatmul.bf16.gmra.mxu0 %v177
    %v192 = vpop.f32.mrf.mxu0
    %v193 = vadd.f32 0.0, %v192
    %v194 = vpop.f32.mrf.mxu0
    %195 = vdwg.mxu0
    %vm196 = vcmask 257024
    %197 = vst.msk [vmem:[#allocation6] sm:$0xf] %vm196, %v193
    %s198 = sadd.s32 %s28, 1
    %s199 = sld [smem:[#allocation3 + %s198]]
    %200 = vxpose.xlu0.b32.start [1/16] %v121, 128
    %201 = vxpose.xlu0.b32.cont [2/16] 0.0, 128
    %202 = vxpose.xlu0.b32.cont [3/16] 0.0, 128
    %203 = vxpose.xlu0.b32.cont [4/16] 0.0, 128
    %204 = vxpose.xlu0.b32.cont [5/16] 0.0, 128
    %205 = vxpose.xlu0.b32.cont [6/16] 0.0, 128
    %206 = vxpose.xlu0.b32.cont [7/16] 0.0, 128
    %207 = vxpose.xlu0.b32.cont [8/16] 0.0, 128
    %208 = vxpose.xlu0.b32.cont [9/16] 0.0, 128
    %209 = vxpose.xlu0.b32.cont [10/16] 0.0, 128
    %210 = vxpose.xlu0.b32.cont [11/16] 0.0, 128
    %211 = vxpose.xlu0.b32.cont [12/16] 0.0, 128
    %212 = vxpose.xlu0.b32.cont [13/16] 0.0, 128
    %213 = vxpose.xlu0.b32.cont [14/16] 0.0, 128
    %214 = vxpose.xlu0.b32.cont [15/16] 0.0, 128
    %215 = vxpose.xlu0.b32.end [16/16] 0.0, 128
    %v216 = vpop.trf.xlu0
    %v217 = vpop.trf.xlu0
    %v218 = vpop.trf.xlu0
    %v219 = vpop.trf.xlu0
    %v220 = vpop.trf.xlu0
    %v221 = vpop.trf.xlu0
    %v222 = vpop.trf.xlu0
    %v223 = vpop.trf.xlu0
    %v224 = vpop.trf.xlu0
    %v225 = vpop.trf.xlu0
    %v226 = vpop.trf.xlu0
    %v227 = vpop.trf.xlu0
    %v228 = vpop.trf.xlu0
    %v229 = vpop.trf.xlu0
    %v230 = vpop.trf.xlu0
    %v231 = vpop.trf.xlu0
    %v232 = vstv %s199
    %vm233 = vcmp.lt.s32.totalorder %v157, %v232
    %v234 = vsel %vm233, %v216, -1e+30
    %v235 = vsel %vm161, %v234, -inf
    %236 = vmax.xlane.f32.xlu0 %v235
    %v237 = vpop.xlane.xlu0 %236
    %v238 = vsub.f32 %v234, %v237
    %v239 = vmul.f32 %v238, 1.442695
    %v240 = vpow.pop %v239
    %v241 = vsel %vm161, %v240, 0.0
    %242 = vadd.xlane.f32.xlu0 %v241
    %v243 = vpop.xlane.xlu0 %242
    %v244 = vrcp.pop %v243
    %v245 = vmul.f32 %v240, %v244
    %s246 = scalar_lea.vmem [#allocation4], 4
    %247 = vst.msk [vmem:[%s246] sm:$0xf] %vm161, %v245
    %v248 = vpack.c.bf16 %v245, %v245
    %v250 = vsel %vm175, %v248, 0
    %v253 = vsel %vm179, %v30, 0
    %255 = vmatpush.bf16.msra.mxu0 0
    %256 = vmatpush.bf16.msra.mxu0 0
    %257 = vmatpush.bf16.msra.mxu0 0
    %258 = vmatpush.bf16.msra.mxu0 0
    %259 = vmatpush.bf16.msra.mxu0 0
    %260 = vmatpush.bf16.msra.mxu0 0
    %261 = vmatpush.bf16.msra.mxu0 0
    %262 = vmatpush.bf16.msra.mxu0 %v253
    %263 = vmatmul.bf16.gmra.mxu0 %v250
    %v264 = vpop.f32.mrf.mxu0
    %v265 = vadd.f32 0.0, %v264
    %v266 = vpop.f32.mrf.mxu0
    %267 = vdwg.mxu0
    %s268 = scalar_lea.vmem [#allocation6], 4
    %269 = vst.msk [vmem:[%s268] sm:$0xf] %vm196, %v265
    // Predicated region
    $region14: #{tpu_custom_call.1} parent=1 // pred_check
      _
    $region15: #{tpu_custom_call.1} parent=1 // pred_check_branch
      %271 = sbr.rel (0) target = $region17
    $region16: #{tpu_custom_call.1} parent=1 // pred_region
      %273 = vsyncadd [#allocation5], 0
      %s274 = sshll.u32 [#allocation4], 4
      %s275 = int_to_ptr.vmem [resolvable:$true] %s274
      %s276 = sshll.u32 %s4, 4
      %s277 = int_to_ptr.hbm [resolvable:$true] %s276
      %282 = dma.vmem_to_hbm [thread:$0]  %s275, 128, %s277, [#allocation5], 64, 64, 4
    $region17: #{tpu_custom_call.1} parent=1 // pred_fallthru
      _
    // Predicated region
    $region18: #{tpu_custom_call.1} parent=1 // pred_check
      _
    $region19: #{tpu_custom_call.1} parent=1 // pred_check_branch
      %284 = sbr.rel (0) target = $region21
    $region20: #{tpu_custom_call.1} parent=1 // pred_region
      %286 = vsyncadd [#allocation7], 0
      %s287 = sshll.u32 [#allocation6], 4
      %s288 = int_to_ptr.vmem [resolvable:$true] %s287
      %s289 = sshll.u32 %s5, 4
      %s290 = int_to_ptr.hbm [resolvable:$true] %s289
      %295 = dma.vmem_to_hbm [thread:$0]  %s288, 128, %s290, [#allocation7], 64, 64, 4
    $region21: #{tpu_custom_call.1} parent=1 // pred_fallthru
      _
    // Predicated region
    $region22: #{tpu_custom_call.1} parent=1 // pred_check
      _
    $region23: #{tpu_custom_call.1} parent=1 // pred_check_branch
      %297 = sbr.rel (0) target = $region25
    $region24: #{tpu_custom_call.1} parent=1 // pred_region
      %299 = dma.done [#allocation5], 128
    $region25: #{tpu_custom_call.1} parent=1 // pred_fallthru
      _
    // Predicated region
    $region26: #{tpu_custom_call.1} parent=1 // pred_check
      _
    $region27: #{tpu_custom_call.1} parent=1 // pred_check_branch
      %301 = sbr.rel (0) target = $region29
    $region28: #{tpu_custom_call.1} parent=1 // pred_region
      %303 = dma.done [#allocation7], 128
    $region29: #{tpu_custom_call.1} parent=1 // pred_fallthru
      _
    %304 = vsyncpa [#allocation5], 1
    %305 = vsyncpa [#allocation7], 1

</llo_original>
